<compile_context>
chip_gen: v7x
topology: tpu7x:2x2x1
jax: 0.10.0
libtpu: 0.0.40
codegen_flags: <defaults>
</compile_context>

<pallas_src>
import math

import jax
import jax.numpy as jnp
from jax.experimental import pallas as pl
from jax.experimental.pallas import tpu as pltpu


def _ets_embed_kernel(x_ref, w_ref, o_ref):
    # x_ref: (TL, Kc)  -- im2col'd causal windows for one (batch, L-tile)
    # w_ref: (Kc, Dp)  -- flattened conv weight (tap-major), lane-padded
    # o_ref: (TL, Dp)
    o_ref[...] = jnp.dot(
        x_ref[...], w_ref[...], preferred_element_type=jnp.float32
    ).astype(o_ref.dtype)


def ets_embedding(x, conv_weight, *, tl_max=1024, min_grid_steps=4):
    """x: (B, L, c_in); conv_weight: (d_model, c_in, 3) (PyTorch layout)."""
    B, L, Cin = x.shape
    D, _, K = conv_weight.shape  # K == 3

    def cdiv(a, b):
        return -(-a // b)

    def round_up(v, m):
        return ((v + m - 1) // m) * m

    # Adaptive time tile: as few tiles as possible under tl_max, but keep
    # enough grid steps so both TensorCores (v7x) get work when L allows.
    nt = cdiv(L, tl_max)
    if B * nt < min_grid_steps:
        nt = min(cdiv(L, 8), cdiv(min_grid_steps, B))
    nt = max(nt, 1)
    TL = round_up(cdiv(L, nt), 8)   # multiple of 8 sublanes
    Lp = nt * TL                    # padded L (== L whenever L = nt*TL exactly)
    Dp = round_up(D, 128)           # lane-dense output last dim
    Kc = K * Cin

    # Causal left-pad (K-1) + right-pad to tiled length, fused into one pad.
    xp = jnp.pad(x, ((0, 0), (K - 1, Lp - L), (0, 0)))         # (B, Lp+K-1, Cin)
    # im2col: concat the K shifted views along channels -> (B, Lp, K*Cin).
    xcat = jnp.concatenate([xp[:, k:k + Lp, :] for k in range(K)], axis=-1)

    # (D, Cin, K) -> (K, Cin, D) -> (Kc, D), zero-padded to lane-dense Dp.
    w = jnp.transpose(conv_weight, (2, 1, 0)).reshape(Kc, D)
    if Dp != D:
        w = jnp.pad(w, ((0, 0), (0, Dp - D)))
    w = w.astype(x.dtype)

    itemsize = jnp.dtype(x.dtype).itemsize
    cost = pl.CostEstimate(
        flops=2 * B * Lp * Kc * Dp,
        transcendentals=0,
        bytes_accessed=itemsize * (B * Lp * (Kc + Dp) + Kc * Dp),
    )

    out = pl.pallas_call(
        _ets_embed_kernel,
        out_shape=jax.ShapeDtypeStruct((B, Lp, Dp), x.dtype),
        grid=(B, nt),
        in_specs=[
            pl.BlockSpec((pl.Squeezed(), TL, Kc), lambda b, t: (b, t, 0)),
            pl.BlockSpec((Kc, Dp), lambda b, t: (0, 0)),
        ],
        out_specs=pl.BlockSpec((pl.Squeezed(), TL, Dp), lambda b, t: (b, t, 0)),
        compiler_params=pltpu.CompilerParams(
            dimension_semantics=("parallel", "parallel")),
        cost_estimate=cost,
    )(xcat, w)

    # Strip time / channel padding only when it exists (identity otherwise).
    if Lp != L or Dp != D:
        out = out[:, :L, :D]
    return out


def _reference(x, conv_weight):
    """Pure-JAX reference of the causal conv (PyTorch-equivalent)."""
    B, L, Cin = x.shape
    D = conv_weight.shape[0]
    xp = jnp.pad(x, ((0, 0), (2, 0), (0, 0)))      # (B, L+2, Cin)
    w = jnp.transpose(conv_weight, (2, 1, 0))      # (3, Cin, D)
    y = jnp.zeros((B, L, D), jnp.float32)
    for k in range(3):
        y = y + jnp.einsum("blc,cd->bld", xp[:, k:k + L, :], w[k])
    return y


def _run_case(key, B, L, c_in, d_model):
    kx, kw = jax.random.split(key)
    x = jax.random.normal(kx, (B, L, c_in), dtype=jnp.float32)
    # Kaiming normal init (fan_in mode, a=0): std = sqrt(2 / (c_in * ksize))
    std = math.sqrt(2.0 / (c_in * 3))
    conv_weight = std * jax.random.normal(kw, (d_model, c_in, 3), dtype=jnp.float32)

    out = ets_embedding(x, conv_weight)
    out = jax.block_until_ready(out)

    ref = _reference(x, conv_weight)
    assert out.shape == (B, L, d_model), out.shape
    assert jnp.allclose(out, ref, atol=1e-5, rtol=1e-5), "mismatch vs reference"


if __name__ == "__main__":
    key = jax.random.PRNGKey(0)
    k1, k2 = jax.random.split(key)

    # Small case consistent with the module.
    _run_case(k1, B=2, L=16, c_in=4, d_model=32)

    # Padded / multi-tile path: L not a multiple of the tile, D not lane-aligned.
    _run_case(k2, B=2, L=90, c_in=7, d_model=160)

    print("KERNEL_OK")
</pallas_src>

<mosaic_0001>
module attributes {stable_mosaic.version = 11 : i64} {
  func.func @_ets_embed_kernel(%arg0: i32, %arg1: i32, %arg2: memref<1x8x12xf32, #tpu.memory_space<vmem>>, %arg3: memref<12x128xf32, #tpu.memory_space<vmem>>, %arg4: memref<1x8x128xf32, #tpu.memory_space<vmem>>) attributes {dimension_semantics = [#tpu.dimension_semantics<parallel>, #tpu.dimension_semantics<parallel>], iteration_bounds = array<i64: 2, 2>, scalar_prefetch = 0 : i64, scratch_operands = 0 : i64, tpu.core_type = #tpu.core_type<tc>, window_params = [{transform_indices = @transform_0, window_bounds = array<i64: 1, 8, 12>}, {pipeline_mode = #tpu.pipeline_mode<synchronous>, transform_indices = @transform_1, window_bounds = array<i64: 12, 128>}, {transform_indices = @transform_2, window_bounds = array<i64: 1, 8, 128>}]} {
    %c0 = arith.constant 0 : index
    %c0_0 = arith.constant 0 : index
    %c0_1 = arith.constant 0 : index
    %0 = vector.load %arg2[%c0, %c0_0, %c0_1] : memref<1x8x12xf32, #tpu.memory_space<vmem>>, vector<1x8x12xf32>
    %1 = vector.shape_cast %0 : vector<1x8x12xf32> to vector<8x12xf32>
    %c0_2 = arith.constant 0 : index
    %c0_3 = arith.constant 0 : index
    %2 = vector.load %arg3[%c0_2, %c0_3] : memref<12x128xf32, #tpu.memory_space<vmem>>, vector<12x128xf32>
    %cst = arith.constant dense<0.000000e+00> : vector<8x128xf32>
    %3 = tpu.matmul %1, %2, %cst {dimension_numbers = #tpu.dot_dimension_numbers<[1], [0], [0], [1], [0, 0, 1, 1], [], []>} : vector<8x12xf32>, vector<12x128xf32>, vector<8x128xf32> -> vector<8x128xf32>
    %c0_4 = arith.constant 0 : index
    %c0_5 = arith.constant 0 : index
    %c0_6 = arith.constant 0 : index
    %4 = vector.load %arg4[%c0_4, %c0_5, %c0_6] : memref<1x8x128xf32, #tpu.memory_space<vmem>>, vector<1x8x128xf32>
    %5 = vector.shape_cast %4 : vector<1x8x128xf32> to vector<8x128xf32>
    %6 = vector.shape_cast %3 : vector<8x128xf32> to vector<1x8x128xf32>
    tpu.vector_store %arg4[%c0_4, %c0_5, %c0_6], %6 {strides = array<i32>} : memref<1x8x128xf32, #tpu.memory_space<vmem>>, vector<1x8x128xf32>,
    return
  }
  func.func @transform_0(%arg0: i32, %arg1: i32) -> (i32, i32, i32) {
    %c0_i32 = arith.constant 0 : i32
    %c0_i32_0 = arith.constant 0 : i32
    return %arg0, %arg1, %c0_i32 : i32, i32, i32
  }
  func.func @transform_1(%arg0: i32, %arg1: i32) -> (i32, i32) {
    %c0_i32 = arith.constant 0 : i32
    %c0_i32_0 = arith.constant 0 : i32
    %c0_i32_1 = arith.constant 0 : i32
    return %c0_i32, %c0_i32_0 : i32, i32
  }
  func.func @transform_2(%arg0: i32, %arg1: i32) -> (i32, i32, i32) {
    %c0_i32 = arith.constant 0 : i32
    %c0_i32_0 = arith.constant 0 : i32
    return %arg0, %arg1, %c0_i32 : i32, i32, i32
  }
}

</mosaic_0001>

<llo_original>
// kernel: tpu_custom_call.1
$region0: #{tpu_custom_call.1}
  #allocation0 [shape = 'u32[]', space=smem, size = 0x4, offset = 0x4, fixed_abs, tag = 'smem constant byte address 0x4 - core index']
  #allocation1 [shape = 'u32[144,128]{1,0:T(1,128)}', space=vmem, size = 0x12000, scoped, tag = 'internal scratch']
  %s0 = inlined_call_operand.vmem [shape: f32[2,16,12], index: 0, kind: input, shape index: {}]
  %s1 = inlined_call_operand.vmem [shape: f32[12,128], index: 1, kind: input, shape index: {}]
  %s2 = inlined_call_operand.hbm [shape: f32[2,16,128], index: 2, kind: output, shape index: {}]
  %s3 = sld [smem:[#allocation0]]
  $region41: #{tpu_custom_call.1} parent=0
    _
  %s5 = ssub.s32 1, %s3
  %s6 = scalar_select 0, %s5, %s3
  $region1: #{tpu_custom_call.1} parent=0
    #allocation2 [shape = 'u8[8192]{0}', space=vmem, size = 0x2000, scoped, tag = 'output window, operand 0']
    #allocation3 [shape = 's32[2]{0}', space=sflag, size = 0x8, scoped, tag = 'scoped memory for tpu_custom_call.1']
    %7 = vsyncpa [#allocation3], 0
    %s8 = scalar_lea.sflag [#allocation3], 1
    %9 = vsyncpa %s8, 0
    loop: start=0, step=1, limit=6
    $region2: #{tpu_custom_call.1} parent=1 // loop_pre_header
      _
    $region3: #{tpu_custom_call.1} parent=1 // loop_header
      %s11 = sphi 0, %s15
      %p12 = scmp.ge.s32.totalorder %s11, 6
      %s18 = sphi 0, %s30
      %s19 = sphi 0, %s26
      %s20 = sphi 0, %s18
      %s21 = sphi 0, %s19
      %s22 = sphi 0, %s20
      %s23 = sphi 0, %s21
      %s35 = sphi 0, %s37
      %s38 = sphi 0, %s35
      %s39 = sphi 0, %s38
      %s55 = sphi 0, %s39
      %s59 = sphi 0, %s59
      %s61 = sphi 0, %s59
      %s62 = sphi 0, %s61
      %s76 = sphi 0, %s62
      %s84 = sphi 0, %s86
      %s87 = sphi 0, %s84
      %s88 = sphi 0, %s87
      %s104 = sphi 0, %s88
    $region4: #{tpu_custom_call.1} parent=1 // loop_header_branch
      %14 = sbr.rel (%p12) target = $region8
    $region5: #{tpu_custom_call.1} parent=1 // loop_body
      %s16 = ssub.s32 %s11, 1
      %s17 = ssub.s32 %s11, 2
      %s24 = sadd.s32 1, %s19
      %p25 = scmp.ge.s32.totalorder %s24, 2
      %s26 = scalar_select %p25, 0, %s24
      %s27 = sadd.s32 1, %s18
      %s28 = scalar_select %p25, %s27, %s18
      %p29 = scmp.ge.s32.totalorder %s28, 2
      %s30 = scalar_select %p29, 0, %s28
      %s31 = ssub.s32 %s18, %s30
      %s32 = ssub.s32 %s19, %s26
      %s33 = sor.u32 %s31, %s32
      %p34 = scmp.eq.s32.totalorder %s33, 0
      %s36 = sadd.s32 %s35, 1
      %s37 = scalar_select %p34, %s35, %s36
      %p40 = pneg %p34
      %p41 = scmp.eq.s32.totalorder %s11, 3
      %p42 = por %p40, %p41
      %p43 = scmp.ne.s32.totalorder %s35, %s38
      %p44 = scmp.eq.s32.totalorder %s11, 0
      %p45 = por %p43, %p44
      %p46 = scmp.ne.s32.totalorder %s35, %s38
      %p47 = scmp.eq.s32.totalorder %s16, 3
      %p48 = por %p46, %p47
      %p49 = scmp.ne.s32.totalorder %s38, %s39
      %p50 = scmp.eq.s32.totalorder %s16, 0
      %p51 = por %p49, %p50
      %p52 = scmp.ne.s32.totalorder %s38, %s39
      %p53 = scmp.eq.s32.totalorder %s17, 3
      %p54 = por %p52, %p53
      %p56 = scmp.ne.s32.totalorder %s39, %s55
      %p57 = scmp.eq.s32.totalorder %s17, 0
      %p58 = por %p56, %p57
      %s60 = sadd.s32 %s59, 1
      %p63 = scmp.eq.s32.totalorder %s11, 3
      %p64 = scmp.ne.s32.totalorder %s59, %s61
      %p65 = scmp.eq.s32.totalorder %s11, 0
      %p66 = por %p64, %p65
      %p67 = scmp.ne.s32.totalorder %s59, %s61
      %p68 = scmp.eq.s32.totalorder %s16, 3
      %p69 = por %p67, %p68
      %p70 = scmp.ne.s32.totalorder %s61, %s62
      %p71 = scmp.eq.s32.totalorder %s16, 0
      %p72 = por %p70, %p71
      %p73 = scmp.ne.s32.totalorder %s61, %s62
      %p74 = scmp.eq.s32.totalorder %s17, 3
      %p75 = por %p73, %p74
      %p77 = scmp.ne.s32.totalorder %s62, %s76
      %p78 = scmp.eq.s32.totalorder %s17, 0
      %p79 = por %p77, %p78
      %s80 = ssub.s32 %s18, %s30
      %s81 = ssub.s32 %s19, %s26
      %s82 = sor.u32 %s80, %s81
      %p83 = scmp.eq.s32.totalorder %s82, 0
      %s85 = sadd.s32 %s84, 1
      %s86 = scalar_select %p83, %s84, %s85
      %p89 = pneg %p83
      %p90 = scmp.eq.s32.totalorder %s11, 3
      %p91 = por %p89, %p90
      %p92 = scmp.ne.s32.totalorder %s84, %s87
      %p93 = scmp.eq.s32.totalorder %s11, 0
      %p94 = por %p92, %p93
      %p95 = scmp.ne.s32.totalorder %s84, %s87
      %p96 = scmp.eq.s32.totalorder %s16, 3
      %p97 = por %p95, %p96
      %p98 = scmp.ne.s32.totalorder %s87, %s88
      %p99 = scmp.eq.s32.totalorder %s16, 0
      %p100 = por %p98, %p99
      %p101 = scmp.ne.s32.totalorder %s87, %s88
      %p102 = scmp.eq.s32.totalorder %s17, 3
      %p103 = por %p101, %p102
      %p105 = scmp.ne.s32.totalorder %s88, %s104
      %p106 = scmp.eq.s32.totalorder %s17, 0
      %p107 = por %p105, %p106
      %p108 = scmp.le.s32.totalorder 1, %s11
      %p109 = scmp.lt.s32.totalorder %s11, 5
      %p110 = pnand %p108, %p109
      %p111 = pneg %p110
      // Predicated region
      $region9: #{tpu_custom_call.1} parent=5 // pred_check
        _
      $region10: #{tpu_custom_call.1} parent=5 // pred_check_branch
        %113 = sbr.rel (%p110) target = $region12
      $region11: #{tpu_custom_call.1} parent=5 // pred_region
        %s114 = ssub.s32 %s11, 1
        // Predicated region
        $region13: #{tpu_custom_call.1} parent=11 // pred_check
          %p115 = pneg %p72
        $region14: #{tpu_custom_call.1} parent=11 // pred_check_branch
          %117 = sbr.rel (%p115) target = $region16
        $region15: #{tpu_custom_call.1} parent=11 // pred_region
          _
        $region16: #{tpu_custom_call.1} parent=11 // pred_fallthru
          _
      $region12: #{tpu_custom_call.1} parent=5 // pred_fallthru
        _
      %p118 = scmp.lt.s32.totalorder %s11, 4
      // Predicated region
      $region17: #{tpu_custom_call.1} parent=5 // pred_check
        %p119 = pneg %p118
      $region18: #{tpu_custom_call.1} parent=5 // pred_check_branch
        %121 = sbr.rel (%p119) target = $region20
      $region19: #{tpu_custom_call.1} parent=5 // pred_region
        // Predicated region
        $region21: #{tpu_custom_call.1} parent=19 // pred_check
          %p122 = pneg %p45
        $region22: #{tpu_custom_call.1} parent=19 // pred_check_branch
          %124 = sbr.rel (%p122) target = $region24
        $region23: #{tpu_custom_call.1} parent=19 // pred_region
          %p125 = scmp.lt.s32.totalorder %s18, 1
          %s126 = scalar_select %p125, %s18, 1
          %p127 = scmp.lt.s32.totalorder %s19, 1
          %s128 = scalar_select %p127, %s19, 1
          %s129 = smul.addr %s126, 2
          %s130 = sadd.s32 %s128, %s129
          %s131 = smul.addr %s130, 8
          %s132 = scalar_lea.vmem %s0, %s131
        $region24: #{tpu_custom_call.1} parent=19 // pred_fallthru
          _
      $region20: #{tpu_custom_call.1} parent=5 // pred_fallthru
        _
      %p133 = scmp.le.s32.totalorder 1, %s11
      %p134 = scmp.lt.s32.totalorder %s11, 5
      %p135 = pnand %p133, %p134
      %p136 = pneg %p135
      // Predicated region
      $region25: #{tpu_custom_call.1} parent=5 // pred_check
        _
      $region26: #{tpu_custom_call.1} parent=5 // pred_check_branch
        %138 = sbr.rel (%p135) target = $region28
      $region27: #{tpu_custom_call.1} parent=5 // pred_region
        %s139 = ssub.s32 %s11, 1
        %p140 = scmp.lt.s32.totalorder %s20, 1
        %s141 = scalar_select %p140, %s20, 1
        %p142 = scmp.lt.s32.totalorder %s21, 1
        %s143 = scalar_select %p142, %s21, 1
        %s144 = smul.addr %s141, 2
        %s145 = sadd.s32 %s143, %s144
        %s146 = smul.addr %s145, 8
        %s147 = scalar_lea.vmem %s0, %s146
        %p148 = pneg %p51
        %p149 = pneg %p48
        %p150 = pneg %p72
        %p151 = pneg %p69
        %p152 = pneg %p100
        %p153 = pneg %p97
        %s154 = sand.u32 %s87, 1
        %s155 = scalar_lea.sflag [#allocation3], %s154
        %s156 = sand.u32 %s87, 1
        %s157 = smul.addr %s156, 8
        %s158 = scalar_lea.vmem [#allocation2], %s157
        %p159 = scmp.lt.s32.totalorder %s20, 1
        %s160 = scalar_select %p159, %s20, 1
        %p161 = scmp.lt.s32.totalorder %s21, 1
        %s162 = scalar_select %p161, %s21, 1
        %s163 = smul.addr %s160, 2
        %s164 = sadd.s32 %s162, %s163
        %s165 = smul.addr %s164, 8
        %s166 = scalar_lea.vmem %s0, %s165
        %v167 = vld [vmem:[%s166] sm:$0xff]
        %v168 = vld [vmem:[%s1] sm:$0xff]
        %v169 = vld [vmem:[%s1 + $0x8] sm:$0xf]
        %vm170 = vcmask 97280
        %v172 = vsel %vm170, %v167, 0
        %vm174 = vcmask 1043456
        %v176 = vsel %vm174, %v169, 0
        %178 = vmatprep.subr.mxu0 0.0
        %179 = vmatpush1.msra.mxu0 %v168
        %180 = vmatprep.subr.mxu0 0.0
        %181 = vmatpush1.msra.mxu0 %v176
        %182 = vmatprep.subr.mxu0 0.0
        %183 = vmatpush1.msra.mxu0 0.0
        %184 = vmatprep.subr.mxu0 0.0
        %185 = vmatpush1.msra.mxu0 0.0
        %186 = vmatprep.subr.mxu0 0.0
        %187 = vmatpush1.msra.mxu0 0.0
        %188 = vmatprep.subr.mxu0 0.0
        %189 = vmatpush1.msra.mxu0 0.0
        %190 = vmatprep.subr.mxu0 0.0
        %191 = vmatpush1.msra.mxu0 0.0
        %192 = vmatprep.subr.mxu0 0.0
        %193 = vmatpush1.msra.mxu0 0.0
        %194 = vmatprep.subr.mxu0 0.0
        %195 = vmatpush1.msra.mxu0 0.0
        %196 = vmatprep.subr.mxu0 0.0
        %197 = vmatpush1.msra.mxu0 0.0
        %198 = vmatprep.subr.mxu0 0.0
        %199 = vmatpush1.msra.mxu0 0.0
        %200 = vmatprep.subr.mxu0 0.0
        %201 = vmatpush1.msra.mxu0 0.0
        %202 = vmatprep.subr.mxu0 0.0
        %203 = vmatpush1.msra.mxu0 0.0
        %204 = vmatprep.subr.mxu0 0.0
        %205 = vmatpush1.msra.mxu0 0.0
        %206 = vmatprep.subr.mxu0 0.0
        %207 = vmatpush1.msra.mxu0 0.0
        %208 = vmatprep.subr.mxu0 0.0
        %209 = vmatpush1.msra.mxu0 0.0
        %210 = vmatprep.subr.mxu0 0.0
        %211 = vmatpush1.msra.mxu0 0.0
        %212 = vmatprep.subr.mxu0 0.0
        %213 = vmatpush1.msra.mxu0 0.0
        %214 = vmatprep.subr.mxu0 0.0
        %215 = vmatpush1.msra.mxu0 0.0
        %216 = vmatprep.subr.mxu0 0.0
        %217 = vmatpush1.msra.mxu0 0.0
        %218 = vmatprep.subr.mxu0 0.0
        %219 = vmatpush1.msra.mxu0 0.0
        %220 = vmatprep.subr.mxu0 0.0
        %221 = vmatpush1.msra.mxu0 0.0
        %222 = vmatprep.subr.mxu0 0.0
        %223 = vmatpush1.msra.mxu0 0.0
        %224 = vmatprep.subr.mxu0 0.0
        %225 = vmatpush1.msra.mxu0 0.0
        %226 = vmatprep.subr.mxu0 0.0
        %227 = vmatpush1.msra.mxu0 0.0
        %228 = vmatprep.subr.mxu0 0.0
        %229 = vmatpush1.msra.mxu0 0.0
        %230 = vmatprep.subr.mxu0 0.0
        %231 = vmatpush1.msra.mxu0 0.0
        %232 = vmatprep.subr.mxu0 0.0
        %233 = vmatpush1.msra.mxu0 0.0
        %234 = vmatprep.subr.mxu0 0.0
        %235 = vmatpush1.msra.mxu0 0.0
        %236 = vmatprep.subr.mxu0 0.0
        %237 = vmatpush1.msra.mxu0 0.0
        %238 = vmatprep.subr.mxu0 0.0
        %239 = vmatpush1.msra.mxu0 0.0
        %240 = vmatprep.subr.mxu0 0.0
        %241 = vmatpush1.msra.mxu0 0.0
        %242 = vmatprep.mubr.f32.mxu0 0.0
        %243 = vmatmul.mubr.f32.gmra.mrb[0].mxu0 %v172
        %v244 = vpop.f32.mrb[0].mxu0
        %v245 = vadd.f32 0.0, %v244
        %v246 = vpop.f32.mrb[0].mxu0
        %247 = vdwg.mxu0
        %248 = vst [vmem:[%s158] sm:$0xff] %v245
        %s249 = sand.u32 %s87, 1
        %s250 = scalar_lea.sflag [#allocation3], %s249
        %s251 = sand.u32 %s87, 1
        %s252 = smul.addr %s251, 8
        %s253 = scalar_lea.vmem [#allocation2], %s252
        // Predicated region
        $region29: #{tpu_custom_call.1} parent=27 // pred_check
          %p254 = pneg %p97
        $region30: #{tpu_custom_call.1} parent=27 // pred_check_branch
          %256 = sbr.rel (%p254) target = $region32
        $region31: #{tpu_custom_call.1} parent=27 // pred_region
          %s258 = ssub.s32 128, 128
          %259 = vsyncadd %s250, %s258
          %s260 = smul.addr %s20, 2
          %s261 = sadd.s32 %s21, %s260
          %s262 = smul.addr %s261, 128
          %s263 = scalar_lea.hbm %s2, %s262
          %s265 = sshll.u32 %s253, 4
          %s266 = int_to_ptr.vmem [resolvable:$true] %s265
          %268 = dma.vmem_to_hbm [thread:$0]  %s266, 128, %s263, %s250
        $region32: #{tpu_custom_call.1} parent=27 // pred_fallthru
          _
      $region28: #{tpu_custom_call.1} parent=5 // pred_fallthru
        _
      %p269 = scmp.le.s32.totalorder 2, %s11
      // Predicated region
      $region33: #{tpu_custom_call.1} parent=5 // pred_check
        %p270 = pneg %p269
      $region34: #{tpu_custom_call.1} parent=5 // pred_check_branch
        %272 = sbr.rel (%p270) target = $region36
      $region35: #{tpu_custom_call.1} parent=5 // pred_region
        %s273 = ssub.s32 %s11, 2
        // Predicated region
        $region37: #{tpu_custom_call.1} parent=35 // pred_check
          %p274 = pneg %p103
        $region38: #{tpu_custom_call.1} parent=35 // pred_check_branch
          %276 = sbr.rel (%p274) target = $region40
        $region39: #{tpu_custom_call.1} parent=35 // pred_region
          %s277 = sand.u32 %s88, 1
          %s278 = scalar_lea.sflag [#allocation3], %s277
          %s279 = sand.u32 %s88, 1
          %s280 = smul.addr %s279, 8
          %s281 = scalar_lea.vmem [#allocation2], %s280
          %282 = dma.done %s278, 128
        $region40: #{tpu_custom_call.1} parent=35 // pred_fallthru
          _
      $region36: #{tpu_custom_call.1} parent=5 // pred_fallthru
        _
    $region6: #{tpu_custom_call.1} parent=1 // loop_footer
      %s15 = sadd.s32 1, %s11
    $region7: #{tpu_custom_call.1} parent=1 // loop_footer_branch
      %10 = sbr.rel target = $region3
    $region8: #{tpu_custom_call.1} parent=1 // loop_exit
      _
    %283 = vsyncpa [#allocation3], 1
    %s284 = scalar_lea.sflag [#allocation3], 1
    %285 = vsyncpa %s284, 1

</llo_original>
